<compile_context>
chip_gen: v5e
topology: v5e:2x2
jax: 0.10.0
libtpu: 0.0.40
codegen_flags: <defaults>
</compile_context>

<pallas_src>
import jax
import jax.numpy as jnp
from jax.experimental import pallas as pl
from jax.experimental.pallas import tpu as pltpu

CIN = 32
COUT = 64
LANE = 128
TARGET_TS = 8192          # spatial lanes per grid step for large images
MAX_LANES = 16384         # cap on bt * ts (double-buffered blocks <= ~12 MiB)
MAX_BT = 8                # cap on batch folding (kernel unroll length)
VMEM_LIMIT = 32 * 1024 * 1024


def _cdiv(a, b):
    return -(-a // b)


def _plan(n, s_p):
    """Pick (bt, ts, num_j): batch fold, spatial tile (lanes), spatial blocks."""
    s_lanes = _cdiv(s_p, LANE)
    if s_lanes * LANE >= TARGET_TS:
        bt, ts = 1, TARGET_TS
    else:
        ts = s_p                      # whole spatial extent in one block
        cap = max(1, MAX_LANES // max(ts, 1))
        pref = min(cap, max(1, n // 2), MAX_BT)
        bt = max(d for d in range(1, n + 1) if n % d == 0 and d <= pref)
    num_j = _cdiv(s_p, ts)
    # keep >= 2 grid programs when possible (v7x has 2 TensorCores per chip)
    if (n // bt) * num_j == 1 and s_lanes >= 2:
        ts = _cdiv(s_lanes, 2) * LANE
        num_j = _cdiv(s_p, ts)
    return bt, ts, num_j


def _fold_minmax_8x128(v1, ts):
    """(COUT, ts) -> (8,128) partial min / max. Layout-preserving VPU folds."""
    if ts % LANE == 0:
        mn = v1[:, 0:LANE]
        mx = v1[:, 0:LANE]
        for k in range(1, ts // LANE):          # fold lane groups (VPU only)
            blk = v1[:, k * LANE:(k + 1) * LANE]
            mn = jnp.minimum(mn, blk)
            mx = jnp.maximum(mx, blk)
        rmn, rmx = mn[0:8], mx[0:8]
        for g in range(1, COUT // 8):           # fold sublane groups (VPU only)
            rmn = jnp.minimum(rmn, mn[g * 8:(g + 1) * 8])
            rmx = jnp.maximum(rmx, mx[g * 8:(g + 1) * 8])
        return rmn, rmx
    # ragged (small, full-extent) tile: scalar reduce, broadcast to one tile
    return (jnp.full((8, LANE), jnp.min(v1), v1.dtype),
            jnp.full((8, LANE), jnp.max(v1), v1.dtype))


def _make_minmax_kernel(bt, ts, s_p):
    needs_mask = (s_p % ts) != 0

    def kernel(w_ref, b_ref, x_ref, mm_ref):
        x = x_ref[...]                                   # (bt, CIN, ts)
        if needs_mask:
            # OOB columns of the ragged last tile hold garbage; force them to 0
            # so v1 there equals bias, which already occurs in the real border
            # of the padded conv output -> min/max neutral.
            lane = jax.lax.broadcasted_iota(jnp.int32, (bt, CIN, ts), 2)
            lane = lane + pl.program_id(1) * ts
            x = jnp.where(lane < s_p, x, 0.0)
        w = w_ref[...]
        b = b_ref[...]
        acc_mn = acc_mx = None
        for bi in range(bt):
            v1 = jnp.dot(w, x[bi], preferred_element_type=jnp.float32) + b
            mn, mx = _fold_minmax_8x128(v1, ts)
            acc_mn = mn if bi == 0 else jnp.minimum(acc_mn, mn)
            acc_mx = mx if bi == 0 else jnp.maximum(acc_mx, mx)
        mm_ref[0:8, :] = acc_mn
        mm_ref[8:16, :] = acc_mx

    return kernel


def _make_conv_scale_kernel(bt):
    def kernel(w_ref, b_ref, x_ref, o_ref):
        # w/b already carry the scale: out = (W*s) @ x + (b*s + 0.5)
        w = w_ref[...]
        b = b_ref[...]
        for bi in range(bt):
            v1 = jnp.dot(w, x_ref[bi], preferred_element_type=jnp.float32)
            o_ref[bi] = v1 + b
    return kernel


def model_forward(x, weight, bias):
    """x: (N, 32, H, W) f32; weight: (64, 32, 1, 1) f32; bias: (64,) f32."""
    n, cin, h, w = x.shape
    assert cin == CIN
    hp, wp = h + 2, w + 2
    s_p = hp * wp

    # One pad pass over the input (the conv's padding=1); flattened spatial is
    # the lane-dense last dim, so the padded output can be written directly.
    x_pad = jnp.pad(x, ((0, 0), (0, 0), (1, 1), (1, 1))).reshape(n, CIN, s_p)
    w_mat = weight.reshape(COUT, CIN)
    b_col = bias.reshape(COUT, 1)

    bt, ts, num_j = _plan(n, s_p)
    num_i = n // bt
    grid = (num_i, num_j)

    cparams = pltpu.CompilerParams(
        dimension_semantics=("parallel", "parallel"),
        vmem_limit_bytes=VMEM_LIMIT)

    w_spec = pl.BlockSpec((COUT, CIN), lambda i, j: (0, 0))
    b_spec = pl.BlockSpec((COUT, 1), lambda i, j: (0, 0))
    x_spec = pl.BlockSpec((bt, CIN, ts), lambda i, j: (i, 0, j))

    # ---- Pass 1: per-tile (8,128) min/max partials of v1 (no v1 in HBM). ----
    mm = pl.pallas_call(
        _make_minmax_kernel(bt, ts, s_p),
        out_shape=jax.ShapeDtypeStruct((num_i, num_j, 16, LANE), jnp.float32),
        grid=grid,
        in_specs=[w_spec, b_spec, x_spec],
        out_specs=pl.BlockSpec((None, None, 16, LANE), lambda i, j: (i, j, 0, 0)),
        compiler_params=cparams,
    )(w_mat, b_col, x_pad)

    gmin = jnp.min(mm[:, :, 0:8, :])
    gmax = jnp.max(mm[:, :, 8:16, :])
    # torch.clamp(min(v1), max(v1), 6) == min(max(gmin, gmax), 6)
    c = jnp.minimum(jnp.maximum(gmin, gmax), 6.0)
    scale = c / 6.0                       # (v*c + 3)/6 == v*(c/6) + 0.5
    w_scaled = w_mat * scale              # fold scale into the tiny weights
    b_scaled = (bias * scale + 0.5).reshape(COUT, 1)

    # ---- Pass 2: recompute the cheap matmul, write the final padded output. --
    out_flat = pl.pallas_call(
        _make_conv_scale_kernel(bt),
        out_shape=jax.ShapeDtypeStruct((n, COUT, s_p), jnp.float32),
        grid=grid,
        in_specs=[w_spec, b_spec, x_spec],
        out_specs=pl.BlockSpec((bt, COUT, ts), lambda i, j: (i, 0, j)),
        compiler_params=cparams,
    )(w_scaled, b_scaled, x_pad)

    return out_flat.reshape(n, COUT, hp, wp)   # free (bitcast) reshape


def _reference(x, weight, bias):
    xp = jnp.pad(x, ((0, 0), (0, 0), (1, 1), (1, 1)))
    v1 = jnp.einsum('nchw,oc->nohw', xp, weight.reshape(COUT, CIN),
                    precision=jax.lax.Precision.HIGHEST) \
        + bias[None, :, None, None]
    c = jnp.minimum(jnp.maximum(jnp.min(v1), jnp.max(v1)), 6.0)
    return (v1 * c + 3.0) / 6.0


if __name__ == "__main__":
    key = jax.random.PRNGKey(0)
    kx, kw, kb, kx2 = jax.random.split(key, 4)

    # deterministic Conv2d-style init (uniform +-1/sqrt(fan_in), fan_in = 32)
    bound = 1.0 / (CIN ** 0.5)
    weight = jax.random.uniform(kw, (COUT, CIN, 1, 1), jnp.float32, -bound, bound)
    bias = jax.random.uniform(kb, (COUT,), jnp.float32, -bound, bound)

    fwd = jax.jit(model_forward)

    # Case 1: small feature map (full-extent spatial block, batch-dim grid).
    N, H, W = 2, 16, 16
    x = jax.random.normal(kx, (N, CIN, H, W), jnp.float32)
    out = jax.block_until_ready(fwd(x, weight, bias))
    ref = _reference(x, weight, bias)
    assert out.shape == (N, COUT, H + 2, W + 2)
    assert jnp.allclose(out, ref, atol=1e-4, rtol=1e-4)

    # Case 2: larger map (8192-lane tiles, ragged boundary block + lane mask).
    N2, H2, W2 = 1, 94, 94
    x2 = jax.random.normal(kx2, (N2, CIN, H2, W2), jnp.float32)
    out2 = jax.block_until_ready(fwd(x2, weight, bias))
    ref2 = _reference(x2, weight, bias)
    assert out2.shape == (N2, COUT, H2 + 2, W2 + 2)
    assert jnp.allclose(out2, ref2, atol=1e-4, rtol=1e-4)

    print("KERNEL_OK")
</pallas_src>

<mosaic_0001>
module attributes {stable_mosaic.version = 11 : i64} {
  func.func @kernel(%arg0: i32, %arg1: i32, %arg2: memref<64x32xf32, #tpu.memory_space<vmem>>, %arg3: memref<64x1xf32, #tpu.memory_space<vmem>>, %arg4: memref<1x32x324xf32, #tpu.memory_space<vmem>>, %arg5: memref<1x1x16x128xf32, #tpu.memory_space<vmem>>) attributes {dimension_semantics = [#tpu.dimension_semantics<parallel>, #tpu.dimension_semantics<parallel>], iteration_bounds = array<i64: 2, 1>, scalar_prefetch = 0 : i64, scratch_operands = 0 : i64, tpu.core_type = #tpu.core_type<tc>, window_params = [{pipeline_mode = #tpu.pipeline_mode<synchronous>, transform_indices = @transform_0, window_bounds = array<i64: 64, 32>}, {pipeline_mode = #tpu.pipeline_mode<synchronous>, transform_indices = @transform_1, window_bounds = array<i64: 64, 1>}, {transform_indices = @transform_2, window_bounds = array<i64: 1, 32, 324>}, {transform_indices = @transform_3, window_bounds = array<i64: 1, 1, 16, 128>}]} {
    %c0 = arith.constant 0 : index
    %c0_0 = arith.constant 0 : index
    %c0_1 = arith.constant 0 : index
    %0 = vector.load %arg4[%c0, %c0_0, %c0_1] : memref<1x32x324xf32, #tpu.memory_space<vmem>>, vector<1x32x324xf32>
    %c0_2 = arith.constant 0 : index
    %c0_3 = arith.constant 0 : index
    %1 = vector.load %arg2[%c0_2, %c0_3] : memref<64x32xf32, #tpu.memory_space<vmem>>, vector<64x32xf32>
    %c0_4 = arith.constant 0 : index
    %c0_5 = arith.constant 0 : index
    %2 = vector.load %arg3[%c0_4, %c0_5] : memref<64x1xf32, #tpu.memory_space<vmem>>, vector<64x1xf32>
    %3 = vector.shape_cast %0 : vector<1x32x324xf32> to vector<32x324xf32>
    %cst = arith.constant dense<0.000000e+00> : vector<64x324xf32>
    %4 = tpu.matmul %1, %3, %cst {dimension_numbers = #tpu.dot_dimension_numbers<[1], [0], [0], [1], [0, 0, 1, 1], [], []>} : vector<64x32xf32>, vector<32x324xf32>, vector<64x324xf32> -> vector<64x324xf32>
    %5 = vector.broadcast %2 : vector<64x1xf32> to vector<64x324xf32>
    %6 = arith.addf %4, %5 : vector<64x324xf32>
    %7 = vector.shape_cast %6 : vector<64x324xf32> to vector<1x64x324xf32>
    %cst_6 = arith.constant dense<0x7F800000> : vector<1xf32>
    %8 = vector.multi_reduction <minimumf>, %7, %cst_6 [1, 2] : vector<1x64x324xf32> to vector<1xf32>
    %9 = vector.shape_cast %8 : vector<1xf32> to vector<1x1x1xf32>
    %10 = vector.extract %9[0, 0, 0] : f32 from vector<1x1x1xf32>
    %11 = vector.broadcast %10 : f32 to vector<8x128xf32>
    %12 = vector.shape_cast %6 : vector<64x324xf32> to vector<1x64x324xf32>
    %cst_7 = arith.constant dense<0xFF800000> : vector<1xf32>
    %13 = vector.multi_reduction <maximumf>, %12, %cst_7 [1, 2] : vector<1x64x324xf32> to vector<1xf32>
    %14 = vector.shape_cast %13 : vector<1xf32> to vector<1x1x1xf32>
    %15 = vector.extract %14[0, 0, 0] : f32 from vector<1x1x1xf32>
    %16 = vector.broadcast %15 : f32 to vector<8x128xf32>
    %c0_8 = arith.constant 0 : index
    %c0_9 = arith.constant 0 : index
    %c0_10 = arith.constant 0 : index
    %c0_11 = arith.constant 0 : index
    %17 = vector.load %arg5[%c0_8, %c0_9, %c0_10, %c0_11] : memref<1x1x16x128xf32, #tpu.memory_space<vmem>>, vector<1x1x8x128xf32>
    %18 = vector.shape_cast %17 : vector<1x1x8x128xf32> to vector<8x128xf32>
    %19 = vector.shape_cast %11 : vector<8x128xf32> to vector<1x1x8x128xf32>
    tpu.vector_store %arg5[%c0_8, %c0_9, %c0_10, %c0_11], %19 {strides = array<i32>} : memref<1x1x16x128xf32, #tpu.memory_space<vmem>>, vector<1x1x8x128xf32>,
    %c0_12 = arith.constant 0 : index
    %c0_13 = arith.constant 0 : index
    %c8 = arith.constant 8 : index
    %c0_14 = arith.constant 0 : index
    %20 = vector.load %arg5[%c0_12, %c0_13, %c8, %c0_14] : memref<1x1x16x128xf32, #tpu.memory_space<vmem>>, vector<1x1x8x128xf32>
    %21 = vector.shape_cast %20 : vector<1x1x8x128xf32> to vector<8x128xf32>
    %22 = vector.shape_cast %16 : vector<8x128xf32> to vector<1x1x8x128xf32>
    tpu.vector_store %arg5[%c0_12, %c0_13, %c8, %c0_14], %22 {strides = array<i32>} : memref<1x1x16x128xf32, #tpu.memory_space<vmem>>, vector<1x1x8x128xf32>,
    return
  }
  func.func @transform_0(%arg0: i32, %arg1: i32) -> (i32, i32) {
    %c0_i32 = arith.constant 0 : i32
    %c0_i32_0 = arith.constant 0 : i32
    %c0_i32_1 = arith.constant 0 : i32
    return %c0_i32, %c0_i32_0 : i32, i32
  }
  func.func @transform_1(%arg0: i32, %arg1: i32) -> (i32, i32) {
    %c0_i32 = arith.constant 0 : i32
    %c0_i32_0 = arith.constant 0 : i32
    %c0_i32_1 = arith.constant 0 : i32
    return %c0_i32, %c0_i32_0 : i32, i32
  }
  func.func @transform_2(%arg0: i32, %arg1: i32) -> (i32, i32, i32) {
    %c0_i32 = arith.constant 0 : i32
    %c0_i32_0 = arith.constant 0 : i32
    return %arg0, %c0_i32, %arg1 : i32, i32, i32
  }
  func.func @transform_3(%arg0: i32, %arg1: i32) -> (i32, i32, i32, i32) {
    %c0_i32 = arith.constant 0 : i32
    %c0_i32_0 = arith.constant 0 : i32
    %c0_i32_1 = arith.constant 0 : i32
    return %arg0, %arg1, %c0_i32, %c0_i32_0 : i32, i32, i32, i32
  }
}

module attributes {stable_mosaic.version = 11 : i64} {
  func.func @kernel(%arg0: i32, %arg1: i32, %arg2: memref<64x32xf32, #tpu.memory_space<vmem>>, %arg3: memref<64x1xf32, #tpu.memory_space<vmem>>, %arg4: memref<1x32x324xf32, #tpu.memory_space<vmem>>, %arg5: memref<1x64x324xf32, #tpu.memory_space<vmem>>) attributes {dimension_semantics = [#tpu.dimension_semantics<parallel>, #tpu.dimension_semantics<parallel>], iteration_bounds = array<i64: 2, 1>, scalar_prefetch = 0 : i64, scratch_operands = 0 : i64, tpu.core_type = #tpu.core_type<tc>, window_params = [{pipeline_mode = #tpu.pipeline_mode<synchronous>, transform_indices = @transform_0, window_bounds = array<i64: 64, 32>}, {pipeline_mode = #tpu.pipeline_mode<synchronous>, transform_indices = @transform_1, window_bounds = array<i64: 64, 1>}, {transform_indices = @transform_2, window_bounds = array<i64: 1, 32, 324>}, {transform_indices = @transform_3, window_bounds = array<i64: 1, 64, 324>}]} {
    %c0 = arith.constant 0 : index
    %c0_0 = arith.constant 0 : index
    %0 = vector.load %arg2[%c0, %c0_0] : memref<64x32xf32, #tpu.memory_space<vmem>>, vector<64x32xf32>
    %c0_1 = arith.constant 0 : index
    %c0_2 = arith.constant 0 : index
    %1 = vector.load %arg3[%c0_1, %c0_2] : memref<64x1xf32, #tpu.memory_space<vmem>>, vector<64x1xf32>
    %c0_3 = arith.constant 0 : index
    %c0_4 = arith.constant 0 : index
    %c0_5 = arith.constant 0 : index
    %2 = vector.load %arg4[%c0_3, %c0_4, %c0_5] : memref<1x32x324xf32, #tpu.memory_space<vmem>>, vector<1x32x324xf32>
    %3 = vector.shape_cast %2 : vector<1x32x324xf32> to vector<32x324xf32>
    %cst = arith.constant dense<0.000000e+00> : vector<64x324xf32>
    %4 = tpu.matmul %0, %3, %cst {dimension_numbers = #tpu.dot_dimension_numbers<[1], [0], [0], [1], [0, 0, 1, 1], [], []>} : vector<64x32xf32>, vector<32x324xf32>, vector<64x324xf32> -> vector<64x324xf32>
    %5 = vector.broadcast %1 : vector<64x1xf32> to vector<64x324xf32>
    %6 = arith.addf %4, %5 : vector<64x324xf32>
    %c0_6 = arith.constant 0 : index
    %c0_7 = arith.constant 0 : index
    %c0_8 = arith.constant 0 : index
    %7 = vector.load %arg5[%c0_6, %c0_7, %c0_8] : memref<1x64x324xf32, #tpu.memory_space<vmem>>, vector<1x64x324xf32>
    %8 = vector.shape_cast %7 : vector<1x64x324xf32> to vector<64x324xf32>
    %9 = vector.shape_cast %6 : vector<64x324xf32> to vector<1x64x324xf32>
    tpu.vector_store %arg5[%c0_6, %c0_7, %c0_8], %9 {strides = array<i32>} : memref<1x64x324xf32, #tpu.memory_space<vmem>>, vector<1x64x324xf32>,
    return
  }
  func.func @transform_0(%arg0: i32, %arg1: i32) -> (i32, i32) {
    %c0_i32 = arith.constant 0 : i32
    %c0_i32_0 = arith.constant 0 : i32
    %c0_i32_1 = arith.constant 0 : i32
    return %c0_i32, %c0_i32_0 : i32, i32
  }
  func.func @transform_1(%arg0: i32, %arg1: i32) -> (i32, i32) {
    %c0_i32 = arith.constant 0 : i32
    %c0_i32_0 = arith.constant 0 : i32
    %c0_i32_1 = arith.constant 0 : i32
    return %c0_i32, %c0_i32_0 : i32, i32
  }
  func.func @transform_2(%arg0: i32, %arg1: i32) -> (i32, i32, i32) {
    %c0_i32 = arith.constant 0 : i32
    %c0_i32_0 = arith.constant 0 : i32
    return %arg0, %c0_i32, %arg1 : i32, i32, i32
  }
  func.func @transform_3(%arg0: i32, %arg1: i32) -> (i32, i32, i32) {
    %c0_i32 = arith.constant 0 : i32
    %c0_i32_0 = arith.constant 0 : i32
    return %arg0, %c0_i32, %arg1 : i32, i32, i32
  }
}

</mosaic_0001>

<llo_original>
// kernel: model_forward.2
$region0: #{model_forward.2}
  #allocation0 [shape = 'u32[]', space=smem, size = 0x4, offset = 0x4, fixed_abs, tag = 'smem constant byte address 0x4 - core index']
  #allocation1 [shape = 'u32[72,128]{1,0:T(1,128)}', space=vmem, size = 0x9000, scoped, tag = 'internal scratch']
  %s0 = inlined_call_operand.vmem [shape: f32[64,32], index: 0, kind: input, shape index: {}]
  %s1 = inlined_call_operand.vmem [shape: f32[64,1], index: 1, kind: input, shape index: {}]
  %s2 = inlined_call_operand.vmem [shape: f32[2,32,324], index: 2, kind: input, shape index: {}]
  %s3 = inlined_call_operand.vmem [shape: f32[2,1,16,128], index: 3, kind: output, shape index: {}]
  %s4 = sld [smem:[#allocation0]]
  $region45: #{model_forward.2} parent=0
    _
  %s6 = ssub.s32 1, %s4
  %s7 = scalar_select 0, %s6, %s4
  loop: start=0, step=1, limit=4
  $region2: #{model_forward.2} parent=0 // loop_pre_header
    _
  $region3: #{model_forward.2} parent=0 // loop_header
    %s9 = sphi 0, %s13
    %p10 = scmp.ge.s32.totalorder %s9, 4
    %s16 = sphi 0, %s28
    %s17 = sphi 0, %s24
    %s18 = sphi 0, %s16
    %s19 = sphi 0, %s17
    %s20 = sphi 0, %s18
    %s21 = sphi 0, %s19
    %s29 = sphi 0, %s29
    %s31 = sphi 0, %s29
    %s32 = sphi 0, %s31
    %s46 = sphi 0, %s32
    %s50 = sphi 0, %s50
    %s52 = sphi 0, %s50
    %s53 = sphi 0, %s52
    %s67 = sphi 0, %s53
    %s75 = sphi 0, %s77
    %s78 = sphi 0, %s75
    %s79 = sphi 0, %s78
    %s95 = sphi 0, %s79
    %s103 = sphi 0, %s105
    %s106 = sphi 0, %s103
    %s107 = sphi 0, %s106
    %s123 = sphi 0, %s107
  $region4: #{model_forward.2} parent=0 // loop_header_branch
    %12 = sbr.rel (%p10) target = $region8
  $region5: #{model_forward.2} parent=0 // loop_body
    %s14 = ssub.s32 %s9, 1
    %s15 = ssub.s32 %s9, 2
    %s22 = sadd.s32 1, %s17
    %p23 = scmp.ge.s32.totalorder %s22, 1
    %s24 = scalar_select %p23, 0, %s22
    %s25 = sadd.s32 1, %s16
    %s26 = scalar_select %p23, %s25, %s16
    %p27 = scmp.ge.s32.totalorder %s26, 2
    %s28 = scalar_select %p27, 0, %s26
    %s30 = sadd.s32 %s29, 1
    %p33 = scmp.eq.s32.totalorder %s9, 1
    %p34 = scmp.ne.s32.totalorder %s29, %s31
    %p35 = scmp.eq.s32.totalorder %s9, 0
    %p36 = por %p34, %p35
    %p37 = scmp.ne.s32.totalorder %s29, %s31
    %p38 = scmp.eq.s32.totalorder %s14, 1
    %p39 = por %p37, %p38
    %p40 = scmp.ne.s32.totalorder %s31, %s32
    %p41 = scmp.eq.s32.totalorder %s14, 0
    %p42 = por %p40, %p41
    %p43 = scmp.ne.s32.totalorder %s31, %s32
    %p44 = scmp.eq.s32.totalorder %s15, 1
    %p45 = por %p43, %p44
    %p47 = scmp.ne.s32.totalorder %s32, %s46
    %p48 = scmp.eq.s32.totalorder %s15, 0
    %p49 = por %p47, %p48
    %s51 = sadd.s32 %s50, 1
    %p54 = scmp.eq.s32.totalorder %s9, 1
    %p55 = scmp.ne.s32.totalorder %s50, %s52
    %p56 = scmp.eq.s32.totalorder %s9, 0
    %p57 = por %p55, %p56
    %p58 = scmp.ne.s32.totalorder %s50, %s52
    %p59 = scmp.eq.s32.totalorder %s14, 1
    %p60 = por %p58, %p59
    %p61 = scmp.ne.s32.totalorder %s52, %s53
    %p62 = scmp.eq.s32.totalorder %s14, 0
    %p63 = por %p61, %p62
    %p64 = scmp.ne.s32.totalorder %s52, %s53
    %p65 = scmp.eq.s32.totalorder %s15, 1
    %p66 = por %p64, %p65
    %p68 = scmp.ne.s32.totalorder %s53, %s67
    %p69 = scmp.eq.s32.totalorder %s15, 0
    %p70 = por %p68, %p69
    %s71 = ssub.s32 %s16, %s28
    %s72 = ssub.s32 %s17, %s24
    %s73 = sor.u32 %s71, %s72
    %p74 = scmp.eq.s32.totalorder %s73, 0
    %s76 = sadd.s32 %s75, 1
    %s77 = scalar_select %p74, %s75, %s76
    %p80 = pneg %p74
    %p81 = scmp.eq.s32.totalorder %s9, 1
    %p82 = por %p80, %p81
    %p83 = scmp.ne.s32.totalorder %s75, %s78
    %p84 = scmp.eq.s32.totalorder %s9, 0
    %p85 = por %p83, %p84
    %p86 = scmp.ne.s32.totalorder %s75, %s78
    %p87 = scmp.eq.s32.totalorder %s14, 1
    %p88 = por %p86, %p87
    %p89 = scmp.ne.s32.totalorder %s78, %s79
    %p90 = scmp.eq.s32.totalorder %s14, 0
    %p91 = por %p89, %p90
    %p92 = scmp.ne.s32.totalorder %s78, %s79
    %p93 = scmp.eq.s32.totalorder %s15, 1
    %p94 = por %p92, %p93
    %p96 = scmp.ne.s32.totalorder %s79, %s95
    %p97 = scmp.eq.s32.totalorder %s15, 0
    %p98 = por %p96, %p97
    %s99 = ssub.s32 %s16, %s28
    %s100 = ssub.s32 %s17, %s24
    %s101 = sor.u32 %s99, %s100
    %p102 = scmp.eq.s32.totalorder %s101, 0
    %s104 = sadd.s32 %s103, 1
    %s105 = scalar_select %p102, %s103, %s104
    %p108 = pneg %p102
    %p109 = scmp.eq.s32.totalorder %s9, 1
    %p110 = por %p108, %p109
    %p111 = scmp.ne.s32.totalorder %s103, %s106
    %p112 = scmp.eq.s32.totalorder %s9, 0
    %p113 = por %p111, %p112
    %p114 = scmp.ne.s32.totalorder %s103, %s106
    %p115 = scmp.eq.s32.totalorder %s14, 1
    %p116 = por %p114, %p115
    %p117 = scmp.ne.s32.totalorder %s106, %s107
    %p118 = scmp.eq.s32.totalorder %s14, 0
    %p119 = por %p117, %p118
    %p120 = scmp.ne.s32.totalorder %s106, %s107
    %p121 = scmp.eq.s32.totalorder %s15, 1
    %p122 = por %p120, %p121
    %p124 = scmp.ne.s32.totalorder %s107, %s123
    %p125 = scmp.eq.s32.totalorder %s15, 0
    %p126 = por %p124, %p125
    %p127 = scmp.le.s32.totalorder 1, %s9
    %p128 = scmp.lt.s32.totalorder %s9, 3
    %p129 = pnand %p127, %p128
    %p130 = pneg %p129
    // Predicated region
    $region9: #{model_forward.2} parent=5 // pred_check
      _
    $region10: #{model_forward.2} parent=5 // pred_check_branch
      %132 = sbr.rel (%p129) target = $region12
    $region11: #{model_forward.2} parent=5 // pred_region
      %s133 = ssub.s32 %s9, 1
      // Predicated region
      $region13: #{model_forward.2} parent=11 // pred_check
        %p134 = pneg %p42
      $region14: #{model_forward.2} parent=11 // pred_check_branch
        %136 = sbr.rel (%p134) target = $region16
      $region15: #{model_forward.2} parent=11 // pred_region
        _
      $region16: #{model_forward.2} parent=11 // pred_fallthru
        _
      // Predicated region
      $region17: #{model_forward.2} parent=11 // pred_check
        %p137 = pneg %p63
      $region18: #{model_forward.2} parent=11 // pred_check_branch
        %139 = sbr.rel (%p137) target = $region20
      $region19: #{model_forward.2} parent=11 // pred_region
        _
      $region20: #{model_forward.2} parent=11 // pred_fallthru
        _
    $region12: #{model_forward.2} parent=5 // pred_fallthru
      _
    %p140 = scmp.lt.s32.totalorder %s9, 2
    // Predicated region
    $region21: #{model_forward.2} parent=5 // pred_check
      %p141 = pneg %p140
    $region22: #{model_forward.2} parent=5 // pred_check_branch
      %143 = sbr.rel (%p141) target = $region24
    $region23: #{model_forward.2} parent=5 // pred_region
      // Predicated region
      $region25: #{model_forward.2} parent=23 // pred_check
        %p144 = pneg %p85
      $region26: #{model_forward.2} parent=23 // pred_check_branch
        %146 = sbr.rel (%p144) target = $region28
      $region27: #{model_forward.2} parent=23 // pred_region
        %s147 = smul.u32 3, %s17
        %p148 = scmp.lt.s32.totalorder %s16, 1
        %s149 = scalar_select %p148, %s16, 1
        %p150 = scmp.lt.s32.totalorder %s147, 2
        %s151 = scalar_select %p150, %s147, 2
        %s152 = smul.addr %s149, 12
        %s153 = sadd.s32 %s151, %s152
        %s154 = smul.addr %s153, 8
        %s155 = scalar_lea.vmem %s2, %s154
        %s156 = smul.u32 3, %s17
      $region28: #{model_forward.2} parent=23 // pred_fallthru
        _
    $region24: #{model_forward.2} parent=5 // pred_fallthru
      _
    %p157 = scmp.le.s32.totalorder 1, %s9
    %p158 = scmp.lt.s32.totalorder %s9, 3
    %p159 = pnand %p157, %p158
    %p160 = pneg %p159
    // Predicated region
    $region29: #{model_forward.2} parent=5 // pred_check
      _
    $region30: #{model_forward.2} parent=5 // pred_check_branch
      %162 = sbr.rel (%p159) target = $region32
    $region31: #{model_forward.2} parent=5 // pred_region
      %s163 = ssub.s32 %s9, 1
      %p164 = pneg %p42
      %p165 = pneg %p39
      %p166 = pneg %p63
      %p167 = pneg %p60
      %s168 = smul.u32 3, %s19
      %p169 = scmp.lt.s32.totalorder %s18, 1
      %s170 = scalar_select %p169, %s18, 1
      %p171 = scmp.lt.s32.totalorder %s168, 2
      %s172 = scalar_select %p171, %s168, 2
      %s173 = smul.addr %s170, 12
      %s174 = sadd.s32 %s172, %s173
      %s175 = smul.addr %s174, 8
      %s176 = scalar_lea.vmem %s2, %s175
      %p177 = pneg %p91
      %p178 = pneg %p88
      %p179 = pneg %p119
      %p180 = pneg %p116
      %p181 = scmp.lt.s32.totalorder %s18, 1
      %s182 = scalar_select %p181, %s18, 1
      %p183 = scmp.lt.s32.totalorder %s19, 0
      %s184 = scalar_select %p183, %s19, 0
      %s185 = smul.addr %s184, 2
      %s186 = smul.addr %s182, 2
      %s187 = sadd.s32 %s185, %s186
      %s188 = smul.addr %s187, 8
      %s189 = scalar_lea.vmem %s3, %s188
      %s190 = smul.u32 3, %s19
      %p191 = scmp.lt.s32.totalorder %s18, 1
      %s192 = scalar_select %p191, %s18, 1
      %p193 = scmp.lt.s32.totalorder %s190, 2
      %s194 = scalar_select %p193, %s190, 2
      %s195 = smul.addr %s192, 12
      %s196 = sadd.s32 %s194, %s195
      %s197 = smul.addr %s196, 8
      %s198 = scalar_lea.vmem %s2, %s197
      %s199 = smul.u32 3, %s19
      %p200 = scmp.lt.s32.totalorder %s18, 1
      %s201 = scalar_select %p200, %s18, 1
      %p202 = scmp.lt.s32.totalorder %s19, 0
      %s203 = scalar_select %p202, %s19, 0
      %s204 = smul.addr %s203, 2
      %s205 = smul.addr %s201, 2
      %s206 = sadd.s32 %s204, %s205
      %s207 = smul.addr %s206, 8
      %s208 = scalar_lea.vmem %s3, %s207
      %v209 = vld [vmem:[%s198] sm:$0xff]
      %v210 = vld [vmem:[%s198 + $0x8] sm:$0xff]
      %v211 = vld [vmem:[%s198 + $0x10] sm:$0xff]
      %v212 = vld [vmem:[%s198 + $0x18] sm:$0xff]
      %v213 = vld [vmem:[%s198 + $0x20] sm:$0xff]
      %v214 = vld [vmem:[%s198 + $0x28] sm:$0xff]
      %v215 = vld [vmem:[%s198 + $0x30] sm:$0xff]
      %v216 = vld [vmem:[%s198 + $0x38] sm:$0xff]
      %v217 = vld [vmem:[%s198 + $0x40] sm:$0xff]
      %v218 = vld [vmem:[%s198 + $0x48] sm:$0xff]
      %v219 = vld [vmem:[%s198 + $0x50] sm:$0xff]
      %v220 = vld [vmem:[%s198 + $0x58] sm:$0xff]
      %v221 = vld [vmem:[%s0] sm:$0xff]
      %v222 = vld [vmem:[%s0 + $0x8] sm:$0xff]
      %v223 = vld [vmem:[%s0 + $0x10] sm:$0xff]
      %v224 = vld [vmem:[%s0 + $0x18] sm:$0xff]
      %v225 = vld [vmem:[%s0 + $0x20] sm:$0xff]
      %v226 = vld [vmem:[%s0 + $0x28] sm:$0xff]
      %v227 = vld [vmem:[%s0 + $0x30] sm:$0xff]
      %v228 = vld [vmem:[%s0 + $0x38] sm:$0xff]
      %v229 = vld [vmem:[%s1] sm:$0xff]
      %v230 = vld [vmem:[%s1 + $0x8] sm:$0xff]
      %v231 = vld [vmem:[%s1 + $0x10] sm:$0xff]
      %v232 = vld [vmem:[%s1 + $0x18] sm:$0xff]
      %v233 = vld [vmem:[%s1 + $0x20] sm:$0xff]
      %v234 = vld [vmem:[%s1 + $0x28] sm:$0xff]
      %v235 = vld [vmem:[%s1 + $0x30] sm:$0xff]
      %v236 = vld [vmem:[%s1 + $0x38] sm:$0xff]
      %238 = vset.pattern.permute.xlu0 0
      %239 = vperm.xlu0 %238, %v229
      %v240 = vpop.permute.xlu0 %239
      %243 = vset.pattern.permute.xlu0 0
      %244 = vperm.xlu0 %243, %v230
      %v245 = vpop.permute.xlu0 %244
      %248 = vset.pattern.permute.xlu0 0
      %249 = vperm.xlu0 %248, %v231
      %v250 = vpop.permute.xlu0 %249
      %253 = vset.pattern.permute.xlu0 0
      %254 = vperm.xlu0 %253, %v232
      %v255 = vpop.permute.xlu0 %254
      %258 = vset.pattern.permute.xlu0 0
      %259 = vperm.xlu0 %258, %v233
      %v260 = vpop.permute.xlu0 %259
      %263 = vset.pattern.permute.xlu0 0
      %264 = vperm.xlu0 %263, %v234
      %v265 = vpop.permute.xlu0 %264
      %268 = vset.pattern.permute.xlu0 0
      %269 = vperm.xlu0 %268, %v235
      %v270 = vpop.permute.xlu0 %269
      %273 = vset.pattern.permute.xlu0 0
      %274 = vperm.xlu0 %273, %v236
      %v275 = vpop.permute.xlu0 %274
      %vm277 = vcmask 261120
      %v279 = vsel %vm277, %v221, 0
      %v282 = vsel %vm277, %v222, 0
      %v285 = vsel %vm277, %v223, 0
      %v288 = vsel %vm277, %v224, 0
      %v291 = vsel %vm277, %v225, 0
      %v294 = vsel %vm277, %v226, 0
      %v297 = vsel %vm277, %v227, 0
      %v300 = vsel %vm277, %v228, 0
      %302 = vmatpush.msra.mxu0 0.0
      %303 = vmatpush.msra.mxu0 0.0
      %304 = vmatpush.msra.mxu0 0.0
      %305 = vmatpush.msra.mxu0 0.0
      %306 = vmatpush.msra.mxu0 0.0
      %307 = vmatpush.msra.mxu0 0.0
      %308 = vmatpush.msra.mxu0 0.0
      %309 = vmatpush.msra.mxu0 0.0
      %310 = vmatpush.msra.mxu0 0.0
      %311 = vmatpush.msra.mxu0 0.0
      %312 = vmatpush.msra.mxu0 0.0
      %313 = vmatpush.msra.mxu0 0.0
      %314 = vmatpush.msra.mxu0 %v218
      %315 = vmatpush.msra.mxu0 %v215
      %316 = vmatpush.msra.mxu0 %v212
      %317 = vmatpush.msra.mxu0 %v209
      %318 = vmatmul.f32.gmra.mxu0 %v279
      %v319 = vpop.f32.mrf.mxu0
      %v320 = vadd.f32 %v240, %v319
      %321 = vmatmul.f32.gmra.mxu0 %v282
      %v322 = vpop.f32.mrf.mxu0
      %v323 = vadd.f32 %v245, %v322
      %324 = vmatmul.f32.gmra.mxu0 %v285
      %v325 = vpop.f32.mrf.mxu0
      %v326 = vadd.f32 %v250, %v325
      %327 = vmatmul.f32.gmra.mxu0 %v288
      %v328 = vpop.f32.mrf.mxu0
      %v329 = vadd.f32 %v255, %v328
      %330 = vmatmul.f32.gmra.mxu0 %v291
      %v331 = vpop.f32.mrf.mxu0
      %v332 = vadd.f32 %v260, %v331
      %333 = vmatmul.f32.gmra.mxu0 %v294
      %v334 = vpop.f32.mrf.mxu0
      %v335 = vadd.f32 %v265, %v334
      %336 = vmatmul.f32.gmra.mxu0 %v297
      %v337 = vpop.f32.mrf.mxu0
      %v338 = vadd.f32 %v270, %v337
      %339 = vmatmul.f32.gmra.mxu0 %v300
      %v340 = vpop.f32.mrf.mxu0
      %v341 = vadd.f32 %v275, %v340
      %342 = vdwg.mxu0
      %343 = vmatpush.msra.mxu0 0.0
      %344 = vmatpush.msra.mxu0 0.0
      %345 = vmatpush.msra.mxu0 0.0
      %346 = vmatpush.msra.mxu0 0.0
      %347 = vmatpush.msra.mxu0 0.0
      %348 = vmatpush.msra.mxu0 0.0
      %349 = vmatpush.msra.mxu0 0.0
      %350 = vmatpush.msra.mxu0 0.0
      %351 = vmatpush.msra.mxu0 0.0
      %352 = vmatpush.msra.mxu0 0.0
      %353 = vmatpush.msra.mxu0 0.0
      %354 = vmatpush.msra.mxu0 0.0
      %355 = vmatpush.msra.mxu0 %v219
      %356 = vmatpush.msra.mxu0 %v216
      %357 = vmatpush.msra.mxu0 %v213
      %358 = vmatpush.msra.mxu0 %v210
      %359 = vmatmul.f32.gmra.mxu0 %v279
      %v360 = vpop.f32.mrf.mxu0
      %v361 = vadd.f32 %v240, %v360
      %362 = vmatmul.f32.gmra.mxu0 %v282
      %v363 = vpop.f32.mrf.mxu0
      %v364 = vadd.f32 %v245, %v363
      %365 = vmatmul.f32.gmra.mxu0 %v285
      %v366 = vpop.f32.mrf.mxu0
      %v367 = vadd.f32 %v250, %v366
      %368 = vmatmul.f32.gmra.mxu0 %v288
      %v369 = vpop.f32.mrf.mxu0
      %v370 = vadd.f32 %v255, %v369
      %371 = vmatmul.f32.gmra.mxu0 %v291
      %v372 = vpop.f32.mrf.mxu0
      %v373 = vadd.f32 %v260, %v372
      %374 = vmatmul.f32.gmra.mxu0 %v294
      %v375 = vpop.f32.mrf.mxu0
      %v376 = vadd.f32 %v265, %v375
      %377 = vmatmul.f32.gmra.mxu0 %v297
      %v378 = vpop.f32.mrf.mxu0
      %v379 = vadd.f32 %v270, %v378
      %380 = vmatmul.f32.gmra.mxu0 %v300
      %v381 = vpop.f32.mrf.mxu0
      %v382 = vadd.f32 %v275, %v381
      %383 = vdwg.mxu0
      %384 = vmatpush.msra.mxu0 0.0
      %385 = vmatpush.msra.mxu0 0.0
      %386 = vmatpush.msra.mxu0 0.0
      %387 = vmatpush.msra.mxu0 0.0
      %388 = vmatpush.msra.mxu0 0.0
      %389 = vmatpush.msra.mxu0 0.0
      %390 = vmatpush.msra.mxu0 0.0
      %391 = vmatpush.msra.mxu0 0.0
      %392 = vmatpush.msra.mxu0 0.0
      %393 = vmatpush.msra.mxu0 0.0
      %394 = vmatpush.msra.mxu0 0.0
      %395 = vmatpush.msra.mxu0 0.0
      %396 = vmatpush.msra.mxu0 %v220
      %397 = vmatpush.msra.mxu0 %v217
      %398 = vmatpush.msra.mxu0 %v214
      %399 = vmatpush.msra.mxu0 %v211
      %400 = vmatmul.f32.gmra.mxu0 %v279
      %v401 = vpop.f32.mrf.mxu0
      %v402 = vadd.f32 %v240, %v401
      %403 = vmatmul.f32.gmra.mxu0 %v282
      %v404 = vpop.f32.mrf.mxu0
      %v405 = vadd.f32 %v245, %v404
      %406 = vmatmul.f32.gmra.mxu0 %v285
      %v407 = vpop.f32.mrf.mxu0
      %v408 = vadd.f32 %v250, %v407
      %409 = vmatmul.f32.gmra.mxu0 %v288
      %v410 = vpop.f32.mrf.mxu0
      %v411 = vadd.f32 %v255, %v410
      %412 = vmatmul.f32.gmra.mxu0 %v291
      %v413 = vpop.f32.mrf.mxu0
      %v414 = vadd.f32 %v260, %v413
      %415 = vmatmul.f32.gmra.mxu0 %v294
      %v416 = vpop.f32.mrf.mxu0
      %v417 = vadd.f32 %v265, %v416
      %418 = vmatmul.f32.gmra.mxu0 %v297
      %v419 = vpop.f32.mrf.mxu0
      %v420 = vadd.f32 %v270, %v419
      %421 = vmatmul.f32.gmra.mxu0 %v300
      %v422 = vpop.f32.mrf.mxu0
      %v423 = vadd.f32 %v275, %v422
      %424 = vdwg.mxu0
      %vm425 = vcmask 556032
      %v426 = vsel %vm425, %v402, inf
      %v427 = vmin.f32 %v320, %v364
      %v428 = vsel %vm425, %v405, inf
      %v429 = vmin.f32 %v361, %v428
      %v430 = vmin.f32 %v426, %v326
      %v431 = vmin.f32 %v323, %v367
      %v432 = vsel %vm425, %v408, inf
      %v433 = vmin.f32 %v427, %v432
      %v434 = vmin.f32 %v429, %v329
      %v435 = vmin.f32 %v430, %v370
      %v436 = vsel %vm425, %v411, inf
      %v437 = vmin.f32 %v431, %v436
      %v438 = vmin.f32 %v433, %v332
      %v439 = vmin.f32 %v434, %v373
      %v440 = vsel %vm425, %v414, inf
      %v441 = vmin.f32 %v435, %v440
      %v442 = vmin.f32 %v437, %v335
      %v443 = vmin.f32 %v438, %v376
      %v444 = vsel %vm425, %v417, inf
      %v445 = vmin.f32 %v439, %v444
      %v446 = vmin.f32 %v441, %v338
      %v447 = vmin.f32 %v442, %v379
      %v448 = vsel %vm425, %v420, inf
      %v449 = vmin.f32 %v443, %v448
      %v450 = vmin.f32 %v445, %v341
      %v451 = vmin.f32 %v446, %v382
      %v452 = vsel %vm425, %v423, inf
      %v453 = vmin.f32 %v447, %v452
      %v454 = vmin.f32 %v449, %v450
      %v455 = vmin.f32 %v451, %v453
      %v456 = vmin.f32 %v454, %v455
      %457 = vmin.xlane.f32.xlu0 %v456
      %v458 = vpop.xlane.xlu0 %457
      %v459 = vrot.slane %v458, 4
      %v460 = vmin.f32 %v458, %v459
      %v461 = vrot.slane %v460, 2
      %v462 = vmin.f32 %v460, %v461
      %v463 = vrot.slane %v462, 1
      %v464 = vmin.f32 %v462, %v463
      %s465 = vtos %v464
      %v466 = vsel %vm425, %v402, -inf
      %v467 = vmax.f32 %v320, %v364
      %v468 = vsel %vm425, %v405, -inf
      %v469 = vmax.f32 %v361, %v468
      %v470 = vmax.f32 %v466, %v326
      %v471 = vmax.f32 %v323, %v367
      %v472 = vsel %vm425, %v408, -inf
      %v473 = vmax.f32 %v467, %v472
      %v474 = vmax.f32 %v469, %v329
      %v475 = vmax.f32 %v470, %v370
      %v476 = vsel %vm425, %v411, -inf
      %v477 = vmax.f32 %v471, %v476
      %v478 = vmax.f32 %v473, %v332
      %v479 = vmax.f32 %v474, %v373
      %v480 = vsel %vm425, %v414, -inf
      %v481 = vmax.f32 %v475, %v480
      %v482 = vmax.f32 %v477, %v335
      %v483 = vmax.f32 %v478, %v376
      %v484 = vsel %vm425, %v417, -inf
      %v485 = vmax.f32 %v479, %v484
      %v486 = vmax.f32 %v481, %v338
      %v487 = vmax.f32 %v482, %v379
      %v488 = vsel %vm425, %v420, -inf
      %v489 = vmax.f32 %v483, %v488
      %v490 = vmax.f32 %v485, %v341
      %v491 = vmax.f32 %v486, %v382
      %v492 = vsel %vm425, %v423, -inf
      %v493 = vmax.f32 %v487, %v492
      %v494 = vmax.f32 %v489, %v490
      %v495 = vmax.f32 %v491, %v493
      %v496 = vmax.f32 %v494, %v495
      %497 = vmax.xlane.f32.xlu0 %v496
      %v498 = vpop.xlane.xlu0 %497
      %v499 = vrot.slane %v498, 4
      %v500 = vmax.f32 %v498, %v499
      %v501 = vrot.slane %v500, 2
      %v502 = vmax.f32 %v500, %v501
      %v503 = vrot.slane %v502, 1
      %v504 = vmax.f32 %v502, %v503
      %s505 = vtos %v504
      %v506 = vstv %s465
      %507 = vst [vmem:[%s208] sm:$0xff] %v506
      %v508 = vstv %s505
      %509 = vst [vmem:[%s208 + $0x8] sm:$0xff] %v508
      %p510 = scmp.lt.s32.totalorder %s18, 1
      %s511 = scalar_select %p510, %s18, 1
      %p512 = scmp.lt.s32.totalorder %s19, 0
      %s513 = scalar_select %p512, %s19, 0
      %s514 = smul.addr %s513, 2
      %s515 = smul.addr %s511, 2
      %s516 = sadd.s32 %s514, %s515
      %s517 = smul.addr %s516, 8
      %s518 = scalar_lea.vmem %s3, %s517
      // Predicated region
      $region33: #{model_forward.2} parent=31 // pred_check
        %p519 = pneg %p116
      $region34: #{model_forward.2} parent=31 // pred_check_branch
        %521 = sbr.rel (%p519) target = $region36
      $region35: #{model_forward.2} parent=31 // pred_region
        _
      $region36: #{model_forward.2} parent=31 // pred_fallthru
        _
    $region32: #{model_forward.2} parent=5 // pred_fallthru
      _
    %p522 = scmp.le.s32.totalorder 2, %s9
    // Predicated region
    $region37: #{model_forward.2} parent=5 // pred_check
      %p523 = pneg %p522
    $region38: #{model_forward.2} parent=5 // pred_check_branch
      %525 = sbr.rel (%p523) target = $region40
    $region39: #{model_forward.2} parent=5 // pred_region
      %s526 = ssub.s32 %s9, 2
      // Predicated region
      $region41: #{model_forward.2} parent=39 // pred_check
        %p527 = pneg %p122
      $region42: #{model_forward.2} parent=39 // pred_check_branch
        %529 = sbr.rel (%p527) target = $region44
      $region43: #{model_forward.2} parent=39 // pred_region
        %p530 = scmp.lt.s32.totalorder %s20, 1
        %s531 = scalar_select %p530, %s20, 1
        %p532 = scmp.lt.s32.totalorder %s21, 0
        %s533 = scalar_select %p532, %s21, 0
        %s534 = smul.addr %s533, 2
        %s535 = smul.addr %s531, 2
        %s536 = sadd.s32 %s534, %s535
        %s537 = smul.addr %s536, 8
        %s538 = scalar_lea.vmem %s3, %s537
      $region44: #{model_forward.2} parent=39 // pred_fallthru
        _
    $region40: #{model_forward.2} parent=5 // pred_fallthru
      _
  $region6: #{model_forward.2} parent=0 // loop_footer
    %s13 = sadd.s32 1, %s9
  $region7: #{model_forward.2} parent=0 // loop_footer_branch
    %8 = sbr.rel target = $region3
  $region8: #{model_forward.2} parent=0 // loop_exit
    _

// kernel: model_forward.3
$region0: #{model_forward.3}
  #allocation0 [shape = 'u32[]', space=smem, size = 0x4, offset = 0x4, fixed_abs, tag = 'smem constant byte address 0x4 - core index']
  #allocation1 [shape = 'u32[72,128]{1,0:T(1,128)}', space=vmem, size = 0x9000, scoped, tag = 'internal scratch']
  %s0 = inlined_call_operand.vmem [shape: f32[64,32], index: 0, kind: input, shape index: {}]
  %s1 = inlined_call_operand.vmem [shape: f32[64,1], index: 1, kind: input, shape index: {}]
  %s2 = inlined_call_operand.vmem [shape: f32[2,32,324], index: 2, kind: input, shape index: {}]
  %s3 = inlined_call_operand.vmem [shape: f32[2,64,324], index: 3, kind: output, shape index: {}]
  %s4 = sld [smem:[#allocation0]]
  $region45: #{model_forward.3} parent=0
    _
  %s6 = ssub.s32 1, %s4
  %s7 = scalar_select 0, %s6, %s4
  loop: start=0, step=1, limit=4
  $region2: #{model_forward.3} parent=0 // loop_pre_header
    _
  $region3: #{model_forward.3} parent=0 // loop_header
    %s9 = sphi 0, %s13
    %p10 = scmp.ge.s32.totalorder %s9, 4
    %s16 = sphi 0, %s28
    %s17 = sphi 0, %s24
    %s18 = sphi 0, %s16
    %s19 = sphi 0, %s17
    %s20 = sphi 0, %s18
    %s21 = sphi 0, %s19
    %s29 = sphi 0, %s29
    %s31 = sphi 0, %s29
    %s32 = sphi 0, %s31
    %s46 = sphi 0, %s32
    %s50 = sphi 0, %s50
    %s52 = sphi 0, %s50
    %s53 = sphi 0, %s52
    %s67 = sphi 0, %s53
    %s75 = sphi 0, %s77
    %s78 = sphi 0, %s75
    %s79 = sphi 0, %s78
    %s95 = sphi 0, %s79
    %s103 = sphi 0, %s105
    %s106 = sphi 0, %s103
    %s107 = sphi 0, %s106
    %s123 = sphi 0, %s107
  $region4: #{model_forward.3} parent=0 // loop_header_branch
    %12 = sbr.rel (%p10) target = $region8
  $region5: #{model_forward.3} parent=0 // loop_body
    %s14 = ssub.s32 %s9, 1
    %s15 = ssub.s32 %s9, 2
    %s22 = sadd.s32 1, %s17
    %p23 = scmp.ge.s32.totalorder %s22, 1
    %s24 = scalar_select %p23, 0, %s22
    %s25 = sadd.s32 1, %s16
    %s26 = scalar_select %p23, %s25, %s16
    %p27 = scmp.ge.s32.totalorder %s26, 2
    %s28 = scalar_select %p27, 0, %s26
    %s30 = sadd.s32 %s29, 1
    %p33 = scmp.eq.s32.totalorder %s9, 1
    %p34 = scmp.ne.s32.totalorder %s29, %s31
    %p35 = scmp.eq.s32.totalorder %s9, 0
    %p36 = por %p34, %p35
    %p37 = scmp.ne.s32.totalorder %s29, %s31
    %p38 = scmp.eq.s32.totalorder %s14, 1
    %p39 = por %p37, %p38
    %p40 = scmp.ne.s32.totalorder %s31, %s32
    %p41 = scmp.eq.s32.totalorder %s14, 0
    %p42 = por %p40, %p41
    %p43 = scmp.ne.s32.totalorder %s31, %s32
    %p44 = scmp.eq.s32.totalorder %s15, 1
    %p45 = por %p43, %p44
    %p47 = scmp.ne.s32.totalorder %s32, %s46
    %p48 = scmp.eq.s32.totalorder %s15, 0
    %p49 = por %p47, %p48
    %s51 = sadd.s32 %s50, 1
    %p54 = scmp.eq.s32.totalorder %s9, 1
    %p55 = scmp.ne.s32.totalorder %s50, %s52
    %p56 = scmp.eq.s32.totalorder %s9, 0
    %p57 = por %p55, %p56
    %p58 = scmp.ne.s32.totalorder %s50, %s52
    %p59 = scmp.eq.s32.totalorder %s14, 1
    %p60 = por %p58, %p59
    %p61 = scmp.ne.s32.totalorder %s52, %s53
    %p62 = scmp.eq.s32.totalorder %s14, 0
    %p63 = por %p61, %p62
    %p64 = scmp.ne.s32.totalorder %s52, %s53
    %p65 = scmp.eq.s32.totalorder %s15, 1
    %p66 = por %p64, %p65
    %p68 = scmp.ne.s32.totalorder %s53, %s67
    %p69 = scmp.eq.s32.totalorder %s15, 0
    %p70 = por %p68, %p69
    %s71 = ssub.s32 %s16, %s28
    %s72 = ssub.s32 %s17, %s24
    %s73 = sor.u32 %s71, %s72
    %p74 = scmp.eq.s32.totalorder %s73, 0
    %s76 = sadd.s32 %s75, 1
    %s77 = scalar_select %p74, %s75, %s76
    %p80 = pneg %p74
    %p81 = scmp.eq.s32.totalorder %s9, 1
    %p82 = por %p80, %p81
    %p83 = scmp.ne.s32.totalorder %s75, %s78
    %p84 = scmp.eq.s32.totalorder %s9, 0
    %p85 = por %p83, %p84
    %p86 = scmp.ne.s32.totalorder %s75, %s78
    %p87 = scmp.eq.s32.totalorder %s14, 1
    %p88 = por %p86, %p87
    %p89 = scmp.ne.s32.totalorder %s78, %s79
    %p90 = scmp.eq.s32.totalorder %s14, 0
    %p91 = por %p89, %p90
    %p92 = scmp.ne.s32.totalorder %s78, %s79
    %p93 = scmp.eq.s32.totalorder %s15, 1
    %p94 = por %p92, %p93
    %p96 = scmp.ne.s32.totalorder %s79, %s95
    %p97 = scmp.eq.s32.totalorder %s15, 0
    %p98 = por %p96, %p97
    %s99 = ssub.s32 %s16, %s28
    %s100 = ssub.s32 %s17, %s24
    %s101 = sor.u32 %s99, %s100
    %p102 = scmp.eq.s32.totalorder %s101, 0
    %s104 = sadd.s32 %s103, 1
    %s105 = scalar_select %p102, %s103, %s104
    %p108 = pneg %p102
    %p109 = scmp.eq.s32.totalorder %s9, 1
    %p110 = por %p108, %p109
    %p111 = scmp.ne.s32.totalorder %s103, %s106
    %p112 = scmp.eq.s32.totalorder %s9, 0
    %p113 = por %p111, %p112
    %p114 = scmp.ne.s32.totalorder %s103, %s106
    %p115 = scmp.eq.s32.totalorder %s14, 1
    %p116 = por %p114, %p115
    %p117 = scmp.ne.s32.totalorder %s106, %s107
    %p118 = scmp.eq.s32.totalorder %s14, 0
    %p119 = por %p117, %p118
    %p120 = scmp.ne.s32.totalorder %s106, %s107
    %p121 = scmp.eq.s32.totalorder %s15, 1
    %p122 = por %p120, %p121
    %p124 = scmp.ne.s32.totalorder %s107, %s123
    %p125 = scmp.eq.s32.totalorder %s15, 0
    %p126 = por %p124, %p125
    %p127 = scmp.le.s32.totalorder 1, %s9
    %p128 = scmp.lt.s32.totalorder %s9, 3
    %p129 = pnand %p127, %p128
    %p130 = pneg %p129
    // Predicated region
    $region9: #{model_forward.3} parent=5 // pred_check
      _
    $region10: #{model_forward.3} parent=5 // pred_check_branch
      %132 = sbr.rel (%p129) target = $region12
    $region11: #{model_forward.3} parent=5 // pred_region
      %s133 = ssub.s32 %s9, 1
      // Predicated region
      $region13: #{model_forward.3} parent=11 // pred_check
        %p134 = pneg %p42
      $region14: #{model_forward.3} parent=11 // pred_check_branch
        %136 = sbr.rel (%p134) target = $region16
      $region15: #{model_forward.3} parent=11 // pred_region
        _
      $region16: #{model_forward.3} parent=11 // pred_fallthru
        _
      // Predicated region
      $region17: #{model_forward.3} parent=11 // pred_check
        %p137 = pneg %p63
      $region18: #{model_forward.3} parent=11 // pred_check_branch
        %139 = sbr.rel (%p137) target = $region20
      $region19: #{model_forward.3} parent=11 // pred_region
        _
      $region20: #{model_forward.3} parent=11 // pred_fallthru
        _
    $region12: #{model_forward.3} parent=5 // pred_fallthru
      _
    %p140 = scmp.lt.s32.totalorder %s9, 2
    // Predicated region
    $region21: #{model_forward.3} parent=5 // pred_check
      %p141 = pneg %p140
    $region22: #{model_forward.3} parent=5 // pred_check_branch
      %143 = sbr.rel (%p141) target = $region24
    $region23: #{model_forward.3} parent=5 // pred_region
      // Predicated region
      $region25: #{model_forward.3} parent=23 // pred_check
        %p144 = pneg %p85
      $region26: #{model_forward.3} parent=23 // pred_check_branch
        %146 = sbr.rel (%p144) target = $region28
      $region27: #{model_forward.3} parent=23 // pred_region
        %s147 = smul.u32 3, %s17
        %p148 = scmp.lt.s32.totalorder %s16, 1
        %s149 = scalar_select %p148, %s16, 1
        %p150 = scmp.lt.s32.totalorder %s147, 2
        %s151 = scalar_select %p150, %s147, 2
        %s152 = smul.addr %s149, 12
        %s153 = sadd.s32 %s151, %s152
        %s154 = smul.addr %s153, 8
        %s155 = scalar_lea.vmem %s2, %s154
        %s156 = smul.u32 3, %s17
      $region28: #{model_forward.3} parent=23 // pred_fallthru
        _
    $region24: #{model_forward.3} parent=5 // pred_fallthru
      _
    %p157 = scmp.le.s32.totalorder 1, %s9
    %p158 = scmp.lt.s32.totalorder %s9, 3
    %p159 = pnand %p157, %p158
    %p160 = pneg %p159
    // Predicated region
    $region29: #{model_forward.3} parent=5 // pred_check
      _
    $region30: #{model_forward.3} parent=5 // pred_check_branch
      %162 = sbr.rel (%p159) target = $region32
    $region31: #{model_forward.3} parent=5 // pred_region
      %s163 = ssub.s32 %s9, 1
      %p164 = pneg %p42
      %p165 = pneg %p39
      %p166 = pneg %p63
      %p167 = pneg %p60
      %s168 = smul.u32 3, %s19
      %p169 = scmp.lt.s32.totalorder %s18, 1
      %s170 = scalar_select %p169, %s18, 1
      %p171 = scmp.lt.s32.totalorder %s168, 2
      %s172 = scalar_select %p171, %s168, 2
      %s173 = smul.addr %s170, 12
      %s174 = sadd.s32 %s172, %s173
      %s175 = smul.addr %s174, 8
      %s176 = scalar_lea.vmem %s2, %s175
      %p177 = pneg %p91
      %p178 = pneg %p88
      %p179 = pneg %p119
      %p180 = pneg %p116
      %s181 = smul.u32 3, %s19
      %p182 = scmp.lt.s32.totalorder %s18, 1
      %s183 = scalar_select %p182, %s18, 1
      %p184 = scmp.lt.s32.totalorder %s181, 2
      %s185 = scalar_select %p184, %s181, 2
      %s186 = smul.addr %s183, 24
      %s187 = sadd.s32 %s185, %s186
      %s188 = smul.addr %s187, 8
      %s189 = scalar_lea.vmem %s3, %s188
      %s190 = smul.u32 3, %s19
      %p191 = scmp.lt.s32.totalorder %s18, 1
      %s192 = scalar_select %p191, %s18, 1
      %p193 = scmp.lt.s32.totalorder %s190, 2
      %s194 = scalar_select %p193, %s190, 2
      %s195 = smul.addr %s192, 12
      %s196 = sadd.s32 %s194, %s195
      %s197 = smul.addr %s196, 8
      %s198 = scalar_lea.vmem %s2, %s197
      %s199 = smul.u32 3, %s19
      %s200 = smul.u32 3, %s19
      %p201 = scmp.lt.s32.totalorder %s18, 1
      %s202 = scalar_select %p201, %s18, 1
      %p203 = scmp.lt.s32.totalorder %s200, 2
      %s204 = scalar_select %p203, %s200, 2
      %s205 = smul.addr %s202, 24
      %s206 = sadd.s32 %s204, %s205
      %s207 = smul.addr %s206, 8
      %s208 = scalar_lea.vmem %s3, %s207
      %s209 = smul.u32 3, %s19
      %v210 = vld [vmem:[%s0] sm:$0xff]
      %v211 = vld [vmem:[%s0 + $0x8] sm:$0xff]
      %v212 = vld [vmem:[%s0 + $0x10] sm:$0xff]
      %v213 = vld [vmem:[%s0 + $0x18] sm:$0xff]
      %v214 = vld [vmem:[%s0 + $0x20] sm:$0xff]
      %v215 = vld [vmem:[%s0 + $0x28] sm:$0xff]
      %v216 = vld [vmem:[%s0 + $0x30] sm:$0xff]
      %v217 = vld [vmem:[%s0 + $0x38] sm:$0xff]
      %v218 = vld [vmem:[%s1] sm:$0xff]
      %v219 = vld [vmem:[%s1 + $0x8] sm:$0xff]
      %v220 = vld [vmem:[%s1 + $0x10] sm:$0xff]
      %v221 = vld [vmem:[%s1 + $0x18] sm:$0xff]
      %v222 = vld [vmem:[%s1 + $0x20] sm:$0xff]
      %v223 = vld [vmem:[%s1 + $0x28] sm:$0xff]
      %v224 = vld [vmem:[%s1 + $0x30] sm:$0xff]
      %v225 = vld [vmem:[%s1 + $0x38] sm:$0xff]
      %v226 = vld [vmem:[%s198] sm:$0xff]
      %v227 = vld [vmem:[%s198 + $0x8] sm:$0xff]
      %v228 = vld [vmem:[%s198 + $0x10] sm:$0xff]
      %v229 = vld [vmem:[%s198 + $0x18] sm:$0xff]
      %v230 = vld [vmem:[%s198 + $0x20] sm:$0xff]
      %v231 = vld [vmem:[%s198 + $0x28] sm:$0xff]
      %v232 = vld [vmem:[%s198 + $0x30] sm:$0xff]
      %v233 = vld [vmem:[%s198 + $0x38] sm:$0xff]
      %v234 = vld [vmem:[%s198 + $0x40] sm:$0xff]
      %v235 = vld [vmem:[%s198 + $0x48] sm:$0xff]
      %v236 = vld [vmem:[%s198 + $0x50] sm:$0xff]
      %v237 = vld [vmem:[%s198 + $0x58] sm:$0xff]
      %239 = vset.pattern.permute.xlu0 0
      %240 = vperm.xlu0 %239, %v218
      %v241 = vpop.permute.xlu0 %240
      %244 = vset.pattern.permute.xlu0 0
      %245 = vperm.xlu0 %244, %v219
      %v246 = vpop.permute.xlu0 %245
      %249 = vset.pattern.permute.xlu0 0
      %250 = vperm.xlu0 %249, %v220
      %v251 = vpop.permute.xlu0 %250
      %254 = vset.pattern.permute.xlu0 0
      %255 = vperm.xlu0 %254, %v221
      %v256 = vpop.permute.xlu0 %255
      %259 = vset.pattern.permute.xlu0 0
      %260 = vperm.xlu0 %259, %v222
      %v261 = vpop.permute.xlu0 %260
      %264 = vset.pattern.permute.xlu0 0
      %265 = vperm.xlu0 %264, %v223
      %v266 = vpop.permute.xlu0 %265
      %269 = vset.pattern.permute.xlu0 0
      %270 = vperm.xlu0 %269, %v224
      %v271 = vpop.permute.xlu0 %270
      %274 = vset.pattern.permute.xlu0 0
      %275 = vperm.xlu0 %274, %v225
      %v276 = vpop.permute.xlu0 %275
      %vm278 = vcmask 261120
      %v280 = vsel %vm278, %v210, 0
      %v283 = vsel %vm278, %v211, 0
      %v286 = vsel %vm278, %v212, 0
      %v289 = vsel %vm278, %v213, 0
      %v292 = vsel %vm278, %v214, 0
      %v295 = vsel %vm278, %v215, 0
      %v298 = vsel %vm278, %v216, 0
      %v301 = vsel %vm278, %v217, 0
      %303 = vmatpush.msra.mxu0 0.0
      %304 = vmatpush.msra.mxu0 0.0
      %305 = vmatpush.msra.mxu0 0.0
      %306 = vmatpush.msra.mxu0 0.0
      %307 = vmatpush.msra.mxu0 0.0
      %308 = vmatpush.msra.mxu0 0.0
      %309 = vmatpush.msra.mxu0 0.0
      %310 = vmatpush.msra.mxu0 0.0
      %311 = vmatpush.msra.mxu0 0.0
      %312 = vmatpush.msra.mxu0 0.0
      %313 = vmatpush.msra.mxu0 0.0
      %314 = vmatpush.msra.mxu0 0.0
      %315 = vmatpush.msra.mxu0 %v235
      %316 = vmatpush.msra.mxu0 %v232
      %317 = vmatpush.msra.mxu0 %v229
      %318 = vmatpush.msra.mxu0 %v226
      %319 = vmatmul.f32.gmra.mxu0 %v280
      %v320 = vpop.f32.mrf.mxu0
      %v321 = vadd.f32 %v241, %v320
      %322 = vmatmul.f32.gmra.mxu0 %v283
      %v323 = vpop.f32.mrf.mxu0
      %v324 = vadd.f32 %v246, %v323
      %325 = vmatmul.f32.gmra.mxu0 %v286
      %v326 = vpop.f32.mrf.mxu0
      %v327 = vadd.f32 %v251, %v326
      %328 = vmatmul.f32.gmra.mxu0 %v289
      %v329 = vpop.f32.mrf.mxu0
      %v330 = vadd.f32 %v256, %v329
      %331 = vmatmul.f32.gmra.mxu0 %v292
      %v332 = vpop.f32.mrf.mxu0
      %v333 = vadd.f32 %v261, %v332
      %334 = vmatmul.f32.gmra.mxu0 %v295
      %v335 = vpop.f32.mrf.mxu0
      %v336 = vadd.f32 %v266, %v335
      %337 = vmatmul.f32.gmra.mxu0 %v298
      %v338 = vpop.f32.mrf.mxu0
      %v339 = vadd.f32 %v271, %v338
      %340 = vmatmul.f32.gmra.mxu0 %v301
      %v341 = vpop.f32.mrf.mxu0
      %v342 = vadd.f32 %v276, %v341
      %343 = vdwg.mxu0
      %344 = vmatpush.msra.mxu0 0.0
      %345 = vmatpush.msra.mxu0 0.0
      %346 = vmatpush.msra.mxu0 0.0
      %347 = vmatpush.msra.mxu0 0.0
      %348 = vmatpush.msra.mxu0 0.0
      %349 = vmatpush.msra.mxu0 0.0
      %350 = vmatpush.msra.mxu0 0.0
      %351 = vmatpush.msra.mxu0 0.0
      %352 = vmatpush.msra.mxu0 0.0
      %353 = vmatpush.msra.mxu0 0.0
      %354 = vmatpush.msra.mxu0 0.0
      %355 = vmatpush.msra.mxu0 0.0
      %356 = vmatpush.msra.mxu0 %v236
      %357 = vmatpush.msra.mxu0 %v233
      %358 = vmatpush.msra.mxu0 %v230
      %359 = vmatpush.msra.mxu0 %v227
      %360 = vmatmul.f32.gmra.mxu0 %v280
      %v361 = vpop.f32.mrf.mxu0
      %v362 = vadd.f32 %v241, %v361
      %363 = vmatmul.f32.gmra.mxu0 %v283
      %v364 = vpop.f32.mrf.mxu0
      %v365 = vadd.f32 %v246, %v364
      %366 = vmatmul.f32.gmra.mxu0 %v286
      %v367 = vpop.f32.mrf.mxu0
      %v368 = vadd.f32 %v251, %v367
      %369 = vmatmul.f32.gmra.mxu0 %v289
      %v370 = vpop.f32.mrf.mxu0
      %v371 = vadd.f32 %v256, %v370
      %372 = vmatmul.f32.gmra.mxu0 %v292
      %v373 = vpop.f32.mrf.mxu0
      %v374 = vadd.f32 %v261, %v373
      %375 = vmatmul.f32.gmra.mxu0 %v295
      %v376 = vpop.f32.mrf.mxu0
      %v377 = vadd.f32 %v266, %v376
      %378 = vmatmul.f32.gmra.mxu0 %v298
      %v379 = vpop.f32.mrf.mxu0
      %v380 = vadd.f32 %v271, %v379
      %381 = vmatmul.f32.gmra.mxu0 %v301
      %v382 = vpop.f32.mrf.mxu0
      %v383 = vadd.f32 %v276, %v382
      %384 = vdwg.mxu0
      %385 = vmatpush.msra.mxu0 0.0
      %386 = vmatpush.msra.mxu0 0.0
      %387 = vmatpush.msra.mxu0 0.0
      %388 = vmatpush.msra.mxu0 0.0
      %389 = vmatpush.msra.mxu0 0.0
      %390 = vmatpush.msra.mxu0 0.0
      %391 = vmatpush.msra.mxu0 0.0
      %392 = vmatpush.msra.mxu0 0.0
      %393 = vmatpush.msra.mxu0 0.0
      %394 = vmatpush.msra.mxu0 0.0
      %395 = vmatpush.msra.mxu0 0.0
      %396 = vmatpush.msra.mxu0 0.0
      %397 = vmatpush.msra.mxu0 %v237
      %398 = vmatpush.msra.mxu0 %v234
      %399 = vmatpush.msra.mxu0 %v231
      %400 = vmatpush.msra.mxu0 %v228
      %401 = vmatmul.f32.gmra.mxu0 %v280
      %v402 = vpop.f32.mrf.mxu0
      %v403 = vadd.f32 %v241, %v402
      %404 = vmatmul.f32.gmra.mxu0 %v283
      %v405 = vpop.f32.mrf.mxu0
      %v406 = vadd.f32 %v246, %v405
      %407 = vmatmul.f32.gmra.mxu0 %v286
      %v408 = vpop.f32.mrf.mxu0
      %v409 = vadd.f32 %v251, %v408
      %410 = vmatmul.f32.gmra.mxu0 %v289
      %v411 = vpop.f32.mrf.mxu0
      %v412 = vadd.f32 %v256, %v411
      %413 = vmatmul.f32.gmra.mxu0 %v292
      %v414 = vpop.f32.mrf.mxu0
      %v415 = vadd.f32 %v261, %v414
      %416 = vmatmul.f32.gmra.mxu0 %v295
      %v417 = vpop.f32.mrf.mxu0
      %v418 = vadd.f32 %v266, %v417
      %419 = vmatmul.f32.gmra.mxu0 %v298
      %v420 = vpop.f32.mrf.mxu0
      %v421 = vadd.f32 %v271, %v420
      %422 = vmatmul.f32.gmra.mxu0 %v301
      %v423 = vpop.f32.mrf.mxu0
      %v424 = vadd.f32 %v276, %v423
      %425 = vdwg.mxu0
      %426 = vst [vmem:[%s208] sm:$0xff] %v321
      %427 = vst [vmem:[%s208 + $0x8] sm:$0xff] %v362
      %vm428 = vcmask 556032
      %429 = vst.msk [vmem:[%s208 + $0x10] sm:$0xff] %vm428, %v403
      %430 = vst [vmem:[%s208 + $0x18] sm:$0xff] %v324
      %431 = vst [vmem:[%s208 + $0x20] sm:$0xff] %v365
      %432 = vst.msk [vmem:[%s208 + $0x28] sm:$0xff] %vm428, %v406
      %433 = vst [vmem:[%s208 + $0x30] sm:$0xff] %v327
      %434 = vst [vmem:[%s208 + $0x38] sm:$0xff] %v368
      %435 = vst.msk [vmem:[%s208 + $0x40] sm:$0xff] %vm428, %v409
      %436 = vst [vmem:[%s208 + $0x48] sm:$0xff] %v330
      %437 = vst [vmem:[%s208 + $0x50] sm:$0xff] %v371
      %438 = vst.msk [vmem:[%s208 + $0x58] sm:$0xff] %vm428, %v412
      %439 = vst [vmem:[%s208 + $0x60] sm:$0xff] %v333
      %440 = vst [vmem:[%s208 + $0x68] sm:$0xff] %v374
      %441 = vst.msk [vmem:[%s208 + $0x70] sm:$0xff] %vm428, %v415
      %442 = vst [vmem:[%s208 + $0x78] sm:$0xff] %v336
      %443 = vst [vmem:[%s208 + $0x80] sm:$0xff] %v377
      %444 = vst.msk [vmem:[%s208 + $0x88] sm:$0xff] %vm428, %v418
      %445 = vst [vmem:[%s208 + $0x90] sm:$0xff] %v339
      %446 = vst [vmem:[%s208 + $0x98] sm:$0xff] %v380
      %447 = vst.msk [vmem:[%s208 + $0xa0] sm:$0xff] %vm428, %v421
      %448 = vst [vmem:[%s208 + $0xa8] sm:$0xff] %v342
      %449 = vst [vmem:[%s208 + $0xb0] sm:$0xff] %v383
      %450 = vst.msk [vmem:[%s208 + $0xb8] sm:$0xff] %vm428, %v424
      %s451 = smul.u32 3, %s19
      %p452 = scmp.lt.s32.totalorder %s18, 1
      %s453 = scalar_select %p452, %s18, 1
      %p454 = scmp.lt.s32.totalorder %s451, 2
      %s455 = scalar_select %p454, %s451, 2
      %s456 = smul.addr %s453, 24
      %s457 = sadd.s32 %s455, %s456
      %s458 = smul.addr %s457, 8
      %s459 = scalar_lea.vmem %s3, %s458
      // Predicated region
      $region33: #{model_forward.3} parent=31 // pred_check
        %p460 = pneg %p116
      $region34: #{model_forward.3} parent=31 // pred_check_branch
        %462 = sbr.rel (%p460) target = $region36
      $region35: #{model_forward.3} parent=31 // pred_region
        %s463 = smul.u32 3, %s19
      $region36: #{model_forward.3} parent=31 // pred_fallthru
        _
    $region32: #{model_forward.3} parent=5 // pred_fallthru
      _
    %p464 = scmp.le.s32.totalorder 2, %s9
    // Predicated region
    $region37: #{model_forward.3} parent=5 // pred_check
      %p465 = pneg %p464
    $region38: #{model_forward.3} parent=5 // pred_check_branch
      %467 = sbr.rel (%p465) target = $region40
    $region39: #{model_forward.3} parent=5 // pred_region
      %s468 = ssub.s32 %s9, 2
      // Predicated region
      $region41: #{model_forward.3} parent=39 // pred_check
        %p469 = pneg %p122
      $region42: #{model_forward.3} parent=39 // pred_check_branch
        %471 = sbr.rel (%p469) target = $region44
      $region43: #{model_forward.3} parent=39 // pred_region
        %s472 = smul.u32 3, %s21
        %p473 = scmp.lt.s32.totalorder %s20, 1
        %s474 = scalar_select %p473, %s20, 1
        %p475 = scmp.lt.s32.totalorder %s472, 2
        %s476 = scalar_select %p475, %s472, 2
        %s477 = smul.addr %s474, 24
        %s478 = sadd.s32 %s476, %s477
        %s479 = smul.addr %s478, 8
        %s480 = scalar_lea.vmem %s3, %s479
      $region44: #{model_forward.3} parent=39 // pred_fallthru
        _
    $region40: #{model_forward.3} parent=5 // pred_fallthru
      _
  $region6: #{model_forward.3} parent=0 // loop_footer
    %s13 = sadd.s32 1, %s9
  $region7: #{model_forward.3} parent=0 // loop_footer_branch
    %8 = sbr.rel target = $region3
  $region8: #{model_forward.3} parent=0 // loop_exit
    _

</llo_original>
